<compile_context>
chip_gen: v7x
topology: tpu7x:2x2x1
jax: 0.10.0
libtpu: 0.0.40
codegen_flags: <defaults>
</compile_context>

<pallas_src>
import functools

import jax
import jax.numpy as jnp
from jax.experimental import pallas as pl
from jax.experimental.pallas import tpu as pltpu

LANE = 128
# Max rows per grid step. Each step costs ~0.35 us of sequential overhead, so we
# want as few steps as possible; 1024 rows keeps the per-step working set at
# ~2.5 MiB, trivially inside the default scoped VMEM on v5e/v6e/v7x.
MAX_ROWS_PER_STEP = 1024


def _round_up(n, m):
    return ((n + m - 1) // m) * m


def _cdiv(a, b):
    return -(-a // b)


def dqn_kernel(x_ref, w1_ref, b1_ref, w2_ref, b2_ref, w3_ref, b3_ref, o_ref):
    out_dim = o_ref.shape[-1]
    # Layer 1: (TB, D_in) @ (D_in, 256) on the MXU, f32 accumulation, +bias, ReLU.
    # TODO(synk): in_dim=8 under-fills the MXU contraction depth; if the
    # observation dim ever grows, pad in_dim to 128 in prepare_params instead.
    x = x_ref[...].astype(w1_ref.dtype)
    h1 = jnp.dot(x, w1_ref[...], preferred_element_type=jnp.float32)
    h1 = jnp.maximum(h1 + b1_ref[...], 0.0)
    # Layer 2: (TB, 256) @ (256, 256)
    h2 = jnp.dot(h1.astype(w2_ref.dtype), w2_ref[...],
                 preferred_element_type=jnp.float32)
    h2 = jnp.maximum(h2 + b2_ref[...], 0.0)
    # Layer 3 (output head, no activation). w3 is lane-padded for the MXU, but
    # only the real out_dim columns are biased and written back to HBM.
    o = jnp.dot(h2.astype(w3_ref.dtype), w3_ref[...],
                preferred_element_type=jnp.float32)
    o_ref[...] = (o[:, :out_dim] + b3_ref[...]).astype(o_ref.dtype)


def prepare_params(params, weight_dtype=jnp.bfloat16):
    """One-time conversion of PyTorch-convention params to kernel layout.

    - weights transposed to (in_features, out_features) and cast to bf16
    - w3 padded to a multiple of 128 lanes (MXU-friendly); b3 stays unpadded
    - biases kept in f32, shaped (1, out) for broadcast after the f32 accumulate
    Returns (prepared_dict, out_dim).
    """
    out_dim = params["w3"].shape[0]
    out_pad = _round_up(out_dim, LANE)

    w1 = params["w1"].T.astype(weight_dtype)                       # (in, 256)
    w2 = params["w2"].T.astype(weight_dtype)                       # (256, 256)
    w3 = jnp.pad(params["w3"].T.astype(weight_dtype),
                 ((0, 0), (0, out_pad - out_dim)))                 # (256, out_pad)
    b1 = params["b1"].reshape(1, -1).astype(jnp.float32)
    b2 = params["b2"].reshape(1, -1).astype(jnp.float32)
    b3 = params["b3"].reshape(1, -1).astype(jnp.float32)           # (1, out_dim)
    prepared = {"w1": w1, "b1": b1, "w2": w2, "b2": b2, "w3": w3, "b3": b3}
    return prepared, out_dim


def _device_kind():
    try:
        return jax.devices()[0].device_kind.lower()
    except Exception:  # pragma: no cover - defensive
        return ""


def _select_batch_tiling(B):
    """Returns (tb, b_pad, n_steps, is_v7).

    Single step whenever possible (block == full array -> no row padding, no
    wrapper row-slice copy). For larger batches, split into the fewest
    8-row-aligned steps; on v7x keep the step count a multiple of the 2
    TensorCores so CORE_PARALLEL can shard the batch axis.
    """
    kind = _device_kind()
    is_v7 = "v7" in kind
    n_cores = 2 if is_v7 else 1

    n_steps = max(1, _cdiv(B, MAX_ROWS_PER_STEP))
    if is_v7 and B >= 16 * n_cores:
        n_steps = max(n_steps, n_cores)
        if n_steps % n_cores:
            n_steps += n_cores - (n_steps % n_cores)

    if n_steps == 1:
        return B, B, 1, is_v7

    tb = _round_up(_cdiv(B, n_steps), 8)
    b_pad = _round_up(B, tb)
    return tb, b_pad, b_pad // tb, is_v7


@functools.partial(jax.jit, static_argnames=("out_dim",))
def dqn_forward(x, prepared, out_dim):
    """x: (B, input_dim) f32. prepared: output of prepare_params. Returns (B, out_dim) f32."""
    B, in_dim = x.shape
    hidden = prepared["w1"].shape[1]
    out_pad = prepared["w3"].shape[1]

    tb, b_pad, n_steps, is_v7 = _select_batch_tiling(B)
    if b_pad != B:
        x = jnp.pad(x, ((0, b_pad - B), (0, 0)))

    flops = 2 * b_pad * (in_dim * hidden + hidden * hidden + hidden * out_pad)
    bytes_accessed = (
        b_pad * in_dim * 4
        + sum(v.size * v.dtype.itemsize for v in prepared.values())
        + b_pad * out_dim * 4
    )

    if n_steps > 1 and is_v7:
        semantics = (pltpu.CORE_PARALLEL,)   # shard batch steps across 2 TCs
    elif n_steps > 1:
        semantics = (pltpu.PARALLEL,)
    else:
        semantics = (pltpu.ARBITRARY,)

    def pinned(shape):  # weights/biases: same block every grid step -> VMEM-resident
        return pl.BlockSpec(shape, lambda i: (0, 0))

    out = pl.pallas_call(
        dqn_kernel,
        out_shape=jax.ShapeDtypeStruct((b_pad, out_dim), jnp.float32),
        grid=(n_steps,),
        in_specs=[
            pl.BlockSpec((tb, in_dim), lambda i: (i, 0)),   # x tile over batch
            pinned(prepared["w1"].shape),
            pinned(prepared["b1"].shape),
            pinned(prepared["w2"].shape),
            pinned(prepared["b2"].shape),
            pinned(prepared["w3"].shape),
            pinned(prepared["b3"].shape),
        ],
        out_specs=pl.BlockSpec((tb, out_dim), lambda i: (i, 0)),
        compiler_params=pltpu.CompilerParams(dimension_semantics=semantics),
        cost_estimate=pl.CostEstimate(
            flops=flops, transcendentals=0, bytes_accessed=bytes_accessed),
    )(x, prepared["w1"], prepared["b1"], prepared["w2"], prepared["b2"],
      prepared["w3"], prepared["b3"])

    return out[:B] if b_pad != B else out


def init_params(key, input_dim, output_dim, hidden=256):
    """Deterministic synthetic init, PyTorch nn.Linear shape conventions: W is (out, in)."""
    ks = jax.random.split(key, 6)

    def uniform(k, shape, fan_in):
        bound = 1.0 / jnp.sqrt(fan_in)
        return jax.random.uniform(k, shape, jnp.float32, -bound, bound)

    return {
        "w1": uniform(ks[0], (hidden, input_dim), input_dim),
        "b1": uniform(ks[1], (hidden,), input_dim),
        "w2": uniform(ks[2], (hidden, hidden), hidden),
        "b2": uniform(ks[3], (hidden,), hidden),
        "w3": uniform(ks[4], (output_dim, hidden), hidden),
        "b3": uniform(ks[5], (output_dim,), hidden),
    }


def dqn_reference_f32(x, params):
    """Pure-JAX f32 reference mirroring PyTorch semantics exactly."""
    h1 = jnp.maximum(x @ params["w1"].T + params["b1"], 0.0)
    h2 = jnp.maximum(h1 @ params["w2"].T + params["b2"], 0.0)
    return h2 @ params["w3"].T + params["b3"]


def dqn_reference_bf16(x, prepared, out_dim):
    """Pure-JAX reference using the SAME bf16-rounded weights as the kernel."""
    h1 = jnp.maximum(
        jnp.dot(x.astype(jnp.bfloat16), prepared["w1"],
                preferred_element_type=jnp.float32) + prepared["b1"], 0.0)
    h2 = jnp.maximum(
        jnp.dot(h1.astype(jnp.bfloat16), prepared["w2"],
                preferred_element_type=jnp.float32) + prepared["b2"], 0.0)
    o = jnp.dot(h2.astype(jnp.bfloat16), prepared["w3"],
                preferred_element_type=jnp.float32)
    return o[:, :out_dim] + prepared["b3"]


def _check(x, prepared, params, out_dim, batch):
    out = jax.block_until_ready(dqn_forward(x, prepared, out_dim=out_dim))
    assert out.shape == (batch, out_dim)
    # Tight check against a reference using the same bf16 weight rounding
    # (validates the kernel), loose check against full-f32 PyTorch semantics
    # (validates the bf16 storage choice is benign at these scales).
    ref_bf16 = dqn_reference_bf16(x, prepared, out_dim)
    assert jnp.allclose(out, ref_bf16, atol=1e-3, rtol=1e-3), "mismatch vs bf16 reference"
    ref_f32 = dqn_reference_f32(x, params)
    assert jnp.allclose(out, ref_f32, atol=5e-2, rtol=5e-2), "mismatch vs f32 reference"


if __name__ == "__main__":
    # LunarLander-v2: observation dim 8, action dim 4
    input_dim, output_dim = 8, 4

    key = jax.random.PRNGKey(0)
    k_params, k_act, k_train = jax.random.split(key, 3)
    params = init_params(k_params, input_dim, output_dim)

    # One-time layout/cast work (out of the hot path).
    prepared, out_dim = prepare_params(params)

    # Acting path: tiny batch, single grid step, no padding.
    batch_act = 2
    x_act = jax.random.normal(k_act, (batch_act, input_dim), jnp.float32)
    _check(x_act, prepared, params, out_dim, batch_act)

    # Training path: larger batch exercising the multi-step tiled grid
    # (and the row-pad path, since 2050 does not split evenly).
    batch_train = 2050
    x_train = jax.random.normal(k_train, (batch_train, input_dim), jnp.float32)
    _check(x_train, prepared, params, out_dim, batch_train)

    print("KERNEL_OK")
</pallas_src>

<mosaic_0001>
module attributes {stable_mosaic.version = 11 : i64} {
  func.func @dqn_kernel(%arg0: i32, %arg1: memref<2x8xf32, #tpu.memory_space<vmem>>, %arg2: memref<8x256xbf16, #tpu.memory_space<vmem>>, %arg3: memref<1x256xf32, #tpu.memory_space<vmem>>, %arg4: memref<256x256xbf16, #tpu.memory_space<vmem>>, %arg5: memref<1x256xf32, #tpu.memory_space<vmem>>, %arg6: memref<256x128xbf16, #tpu.memory_space<vmem>>, %arg7: memref<1x4xf32, #tpu.memory_space<vmem>>, %arg8: memref<2x4xf32, #tpu.memory_space<vmem>>) attributes {dimension_semantics = [#tpu.dimension_semantics<arbitrary>], iteration_bounds = array<i64: 1>, scalar_prefetch = 0 : i64, scratch_operands = 0 : i64, tpu.core_type = #tpu.core_type<tc>, window_params = [{transform_indices = @transform_0, window_bounds = array<i64: 2, 8>}, {pipeline_mode = #tpu.pipeline_mode<synchronous>, transform_indices = @transform_1, window_bounds = array<i64: 8, 256>}, {pipeline_mode = #tpu.pipeline_mode<synchronous>, transform_indices = @transform_2, window_bounds = array<i64: 1, 256>}, {pipeline_mode = #tpu.pipeline_mode<synchronous>, transform_indices = @transform_3, window_bounds = array<i64: 256, 256>}, {pipeline_mode = #tpu.pipeline_mode<synchronous>, transform_indices = @transform_4, window_bounds = array<i64: 1, 256>}, {pipeline_mode = #tpu.pipeline_mode<synchronous>, transform_indices = @transform_5, window_bounds = array<i64: 256, 128>}, {pipeline_mode = #tpu.pipeline_mode<synchronous>, transform_indices = @transform_6, window_bounds = array<i64: 1, 4>}, {transform_indices = @transform_7, window_bounds = array<i64: 2, 4>}]} {
    %c0 = arith.constant 0 : index
    %c0_0 = arith.constant 0 : index
    %0 = vector.load %arg1[%c0, %c0_0] : memref<2x8xf32, #tpu.memory_space<vmem>>, vector<2x8xf32>
    %1 = arith.truncf %0 : vector<2x8xf32> to vector<2x8xbf16>
    %c0_1 = arith.constant 0 : index
    %c0_2 = arith.constant 0 : index
    %2 = vector.load %arg2[%c0_1, %c0_2] : memref<8x256xbf16, #tpu.memory_space<vmem>>, vector<8x256xbf16>
    %cst = arith.constant dense<0.000000e+00> : vector<2x256xf32>
    %3 = tpu.matmul %1, %2, %cst {dimension_numbers = #tpu.dot_dimension_numbers<[1], [0], [0], [1], [0, 0, 1, 1], [], []>} : vector<2x8xbf16>, vector<8x256xbf16>, vector<2x256xf32> -> vector<2x256xf32>
    %c0_3 = arith.constant 0 : index
    %c0_4 = arith.constant 0 : index
    %4 = vector.load %arg3[%c0_3, %c0_4] : memref<1x256xf32, #tpu.memory_space<vmem>>, vector<1x256xf32>
    %5 = vector.broadcast %4 : vector<1x256xf32> to vector<2x256xf32>
    %6 = arith.addf %3, %5 : vector<2x256xf32>
    %cst_5 = arith.constant 0.000000e+00 : f32
    %7 = vector.broadcast %cst_5 : f32 to vector<2x256xf32>
    %8 = arith.maximumf %6, %7 : vector<2x256xf32>
    %9 = arith.truncf %8 : vector<2x256xf32> to vector<2x256xbf16>
    %c0_6 = arith.constant 0 : index
    %c0_7 = arith.constant 0 : index
    %10 = vector.load %arg4[%c0_6, %c0_7] : memref<256x256xbf16, #tpu.memory_space<vmem>>, vector<256x256xbf16>
    %cst_8 = arith.constant dense<0.000000e+00> : vector<2x256xf32>
    %11 = tpu.matmul %9, %10, %cst_8 {dimension_numbers = #tpu.dot_dimension_numbers<[1], [0], [0], [1], [0, 0, 1, 1], [], []>} : vector<2x256xbf16>, vector<256x256xbf16>, vector<2x256xf32> -> vector<2x256xf32>
    %c0_9 = arith.constant 0 : index
    %c0_10 = arith.constant 0 : index
    %12 = vector.load %arg5[%c0_9, %c0_10] : memref<1x256xf32, #tpu.memory_space<vmem>>, vector<1x256xf32>
    %13 = vector.broadcast %12 : vector<1x256xf32> to vector<2x256xf32>
    %14 = arith.addf %11, %13 : vector<2x256xf32>
    %cst_11 = arith.constant 0.000000e+00 : f32
    %15 = vector.broadcast %cst_11 : f32 to vector<2x256xf32>
    %16 = arith.maximumf %14, %15 : vector<2x256xf32>
    %17 = arith.truncf %16 : vector<2x256xf32> to vector<2x256xbf16>
    %c0_12 = arith.constant 0 : index
    %c0_13 = arith.constant 0 : index
    %18 = vector.load %arg6[%c0_12, %c0_13] : memref<256x128xbf16, #tpu.memory_space<vmem>>, vector<256x128xbf16>
    %cst_14 = arith.constant dense<0.000000e+00> : vector<2x128xf32>
    %19 = tpu.matmul %17, %18, %cst_14 {dimension_numbers = #tpu.dot_dimension_numbers<[1], [0], [0], [1], [0, 0, 1, 1], [], []>} : vector<2x256xbf16>, vector<256x128xbf16>, vector<2x128xf32> -> vector<2x128xf32>
    %20 = vector.extract_strided_slice %19 {offsets = [0, 0], sizes = [2, 4], strides = [1, 1]} : vector<2x128xf32> to vector<2x4xf32>
    %c0_15 = arith.constant 0 : index
    %c0_16 = arith.constant 0 : index
    %21 = vector.load %arg7[%c0_15, %c0_16] : memref<1x4xf32, #tpu.memory_space<vmem>>, vector<1x4xf32>
    %22 = vector.broadcast %21 : vector<1x4xf32> to vector<2x4xf32>
    %23 = arith.addf %20, %22 : vector<2x4xf32>
    %c0_17 = arith.constant 0 : index
    %c0_18 = arith.constant 0 : index
    %24 = vector.load %arg8[%c0_17, %c0_18] : memref<2x4xf32, #tpu.memory_space<vmem>>, vector<2x4xf32>
    tpu.vector_store %arg8[%c0_17, %c0_18], %23 {strides = array<i32>} : memref<2x4xf32, #tpu.memory_space<vmem>>, vector<2x4xf32>,
    return
  }
  func.func @transform_0(%arg0: i32) -> (i32, i32) {
    %c0_i32 = arith.constant 0 : i32
    %c0_i32_0 = arith.constant 0 : i32
    return %arg0, %c0_i32 : i32, i32
  }
  func.func @transform_1(%arg0: i32) -> (i32, i32) {
    %c0_i32 = arith.constant 0 : i32
    %c0_i32_0 = arith.constant 0 : i32
    %c0_i32_1 = arith.constant 0 : i32
    return %c0_i32, %c0_i32_0 : i32, i32
  }
  func.func @transform_2(%arg0: i32) -> (i32, i32) {
    %c0_i32 = arith.constant 0 : i32
    %c0_i32_0 = arith.constant 0 : i32
    %c0_i32_1 = arith.constant 0 : i32
    return %c0_i32, %c0_i32_0 : i32, i32
  }
  func.func @transform_3(%arg0: i32) -> (i32, i32) {
    %c0_i32 = arith.constant 0 : i32
    %c0_i32_0 = arith.constant 0 : i32
    %c0_i32_1 = arith.constant 0 : i32
    return %c0_i32, %c0_i32_0 : i32, i32
  }
  func.func @transform_4(%arg0: i32) -> (i32, i32) {
    %c0_i32 = arith.constant 0 : i32
    %c0_i32_0 = arith.constant 0 : i32
    %c0_i32_1 = arith.constant 0 : i32
    return %c0_i32, %c0_i32_0 : i32, i32
  }
  func.func @transform_5(%arg0: i32) -> (i32, i32) {
    %c0_i32 = arith.constant 0 : i32
    %c0_i32_0 = arith.constant 0 : i32
    %c0_i32_1 = arith.constant 0 : i32
    return %c0_i32, %c0_i32_0 : i32, i32
  }
  func.func @transform_6(%arg0: i32) -> (i32, i32) {
    %c0_i32 = arith.constant 0 : i32
    %c0_i32_0 = arith.constant 0 : i32
    %c0_i32_1 = arith.constant 0 : i32
    return %c0_i32, %c0_i32_0 : i32, i32
  }
  func.func @transform_7(%arg0: i32) -> (i32, i32) {
    %c0_i32 = arith.constant 0 : i32
    %c0_i32_0 = arith.constant 0 : i32
    return %arg0, %c0_i32 : i32, i32
  }
}

</mosaic_0001>

<llo_original>
// kernel: dqn_forward.1
$region0: #{dqn_forward.1}
  #allocation0 [shape = 'u32[]', space=smem, size = 0x4, offset = 0x4, fixed_abs, tag = 'smem constant byte address 0x4 - core index']
  #allocation1 [shape = 'u32[144,128]{1,0:T(1,128)}', space=vmem, size = 0x12000, scoped, tag = 'internal scratch']
  %s0 = inlined_call_operand.hbm [shape: f32[2,8], index: 0, kind: input, shape index: {}]
  %s1 = inlined_call_operand.vmem [shape: bf16[8,256], index: 1, kind: input, shape index: {}]
  %s2 = inlined_call_operand.vmem [shape: f32[1,256], index: 2, kind: input, shape index: {}]
  %s3 = inlined_call_operand.hbm [shape: bf16[256,256], index: 3, kind: input, shape index: {}]
  %s4 = inlined_call_operand.vmem [shape: f32[1,256], index: 4, kind: input, shape index: {}]
  %s5 = inlined_call_operand.hbm [shape: bf16[256,128], index: 5, kind: input, shape index: {}]
  %s6 = inlined_call_operand.vmem [shape: f32[1,4], index: 6, kind: input, shape index: {}]
  %s7 = inlined_call_operand.hbm [shape: f32[2,4], index: 7, kind: output, shape index: {}]
  %s8 = sld [smem:[#allocation0]]
  $region50: #{dqn_forward.1} parent=0
    _
  %s10 = ssub.s32 1, %s8
  %s11 = scalar_select 0, %s10, %s8
  $region1: #{dqn_forward.1} parent=0
    #allocation2 [shape = 'u8[1024]{0}', space=vmem, size = 0x400, scoped, tag = 'input window, operand 0, single buffered']
    #allocation3 [shape = 's32[1]{0}', space=sflag, size = 0x4, scoped, tag = 'scoped memory for dqn_forward.1']
    #allocation4 [shape = 's32[1]{0}', space=sflag, size = 0x4, scoped, tag = 'scoped memory for dqn_forward.1']
    #allocation5 [shape = 'u8[131072]{0}', space=vmem, size = 0x20000, scoped, tag = 'input window, operand 3, single buffered']
    #allocation6 [shape = 's32[1]{0}', space=sflag, size = 0x4, scoped, tag = 'scoped memory for dqn_forward.1']
    #allocation7 [shape = 'u8[65536]{0}', space=vmem, size = 0x10000, scoped, tag = 'input window, operand 5, single buffered']
    #allocation8 [shape = 'u8[1024]{0}', space=vmem, size = 0x400, scoped, tag = 'output window, operand 0, single buffered']
    %12 = vsyncpa [#allocation3], 0
    %13 = vsyncpa [#allocation6], 0
    %14 = vsyncpa [#allocation4], 0
    // Predicated region
    $region2: #{dqn_forward.1} parent=1 // pred_check
      _
    $region3: #{dqn_forward.1} parent=1 // pred_check_branch
      %16 = sbr.rel (0) target = $region5
    $region4: #{dqn_forward.1} parent=1 // pred_region
      %s18 = ssub.s32 32, 32
      %19 = vsyncadd [#allocation3], %s18
      %s21 = sshll.u32 [#allocation2], 4
      %s22 = int_to_ptr.vmem [resolvable:$true] %s21
      %24 = dma.hbm_to_vmem [thread:$0]  %s0, 32, %s22, [#allocation3]
    $region5: #{dqn_forward.1} parent=1 // pred_fallthru
      _
    // Predicated region
    $region6: #{dqn_forward.1} parent=1 // pred_check
      _
    $region7: #{dqn_forward.1} parent=1 // pred_check_branch
      %26 = sbr.rel (0) target = $region9
    $region8: #{dqn_forward.1} parent=1 // pred_region
      _
    $region9: #{dqn_forward.1} parent=1 // pred_fallthru
      _
    // Predicated region
    $region10: #{dqn_forward.1} parent=1 // pred_check
      _
    $region11: #{dqn_forward.1} parent=1 // pred_check_branch
      %28 = sbr.rel (0) target = $region13
    $region12: #{dqn_forward.1} parent=1 // pred_region
      _
    $region13: #{dqn_forward.1} parent=1 // pred_fallthru
      _
    // Predicated region
    $region14: #{dqn_forward.1} parent=1 // pred_check
      _
    $region15: #{dqn_forward.1} parent=1 // pred_check_branch
      %30 = sbr.rel (0) target = $region17
    $region16: #{dqn_forward.1} parent=1 // pred_region
      %s32 = ssub.s32 4096, 4096
      %33 = vsyncadd [#allocation6], %s32
      %s34 = sshll.u32 [#allocation5], 4
      %s35 = int_to_ptr.vmem [resolvable:$true] %s34
      %40 = dma.hbm_to_vmem [thread:$0]  %s3, 4096, %s35, [#allocation6], 128, 128, 8
    $region17: #{dqn_forward.1} parent=1 // pred_fallthru
      _
    // Predicated region
    $region18: #{dqn_forward.1} parent=1 // pred_check
      _
    $region19: #{dqn_forward.1} parent=1 // pred_check_branch
      %42 = sbr.rel (0) target = $region21
    $region20: #{dqn_forward.1} parent=1 // pred_region
      _
    $region21: #{dqn_forward.1} parent=1 // pred_fallthru
      _
    // Predicated region
    $region22: #{dqn_forward.1} parent=1 // pred_check
      _
    $region23: #{dqn_forward.1} parent=1 // pred_check_branch
      %44 = sbr.rel (0) target = $region25
    $region24: #{dqn_forward.1} parent=1 // pred_region
      %s46 = ssub.s32 2048, 2048
      %47 = vsyncadd [#allocation6], %s46
      %s48 = sshll.u32 [#allocation7], 4
      %s49 = int_to_ptr.vmem [resolvable:$true] %s48
      %54 = dma.hbm_to_vmem [thread:$0]  %s5, 2048, %s49, [#allocation6], 64, 64, 4
    $region25: #{dqn_forward.1} parent=1 // pred_fallthru
      _
    // Predicated region
    $region26: #{dqn_forward.1} parent=1 // pred_check
      _
    $region27: #{dqn_forward.1} parent=1 // pred_check_branch
      %56 = sbr.rel (0) target = $region29
    $region28: #{dqn_forward.1} parent=1 // pred_region
      _
    $region29: #{dqn_forward.1} parent=1 // pred_fallthru
      _
    // Predicated region
    $region30: #{dqn_forward.1} parent=1 // pred_check
      _
    $region31: #{dqn_forward.1} parent=1 // pred_check_branch
      %58 = sbr.rel (0) target = $region33
    $region32: #{dqn_forward.1} parent=1 // pred_region
      %59 = dma.done [#allocation3], 32
    $region33: #{dqn_forward.1} parent=1 // pred_fallthru
      _
    // Predicated region
    $region34: #{dqn_forward.1} parent=1 // pred_check
      _
    $region35: #{dqn_forward.1} parent=1 // pred_check_branch
      %61 = sbr.rel (0) target = $region37
    $region36: #{dqn_forward.1} parent=1 // pred_region
      %62 = dma.done [#allocation6], 4096
    $region37: #{dqn_forward.1} parent=1 // pred_fallthru
      _
    // Predicated region
    $region38: #{dqn_forward.1} parent=1 // pred_check
      _
    $region39: #{dqn_forward.1} parent=1 // pred_check_branch
      %64 = sbr.rel (0) target = $region41
    $region40: #{dqn_forward.1} parent=1 // pred_region
      %65 = dma.done [#allocation6], 2048
    $region41: #{dqn_forward.1} parent=1 // pred_fallthru
      _
    %v67 = vld [vmem:[#allocation2] sm:$0x3]
    %v68 = vpack.c.bf16 %v67, %v67
    %v69 = vld [vmem:[%s1] sm:$0xff]
    %v70 = vld [vmem:[%s2] sm:$0x3]
    %v72 = vlaneseq
    %v73 = vshrl.u32 %v72, 7
    %v74 = vsub.s32 0, %v73
    %v75 = vrot.slane %v70, %v74
    %v76 = vlaneseq
    %v77 = vshrl.u32 %v76, 7
    %v78 = vsub.s32 1, %v77
    %v79 = vrot.slane %v70, %v78
    %v83 = vunpack.c.l.b16 %v69
    %v84 = vunpack.c.h.b16 %v69
    %v85 = vpack.c.b16 %v83, %v83
    %v86 = vpack.c.b16 %v84, %v84
    %vm87 = vcmask 64512
    %v89 = vsel %vm87, %v68, 0
    %vm91 = vcmask 1043456
    %v93 = vsel %vm91, %v85, 0
    %v96 = vsel %vm91, %v86, 0
    %98 = vmatprep.subr.bf16.mxu0 %v96
    %99 = vmatpush1.bf16.msra.mxu0 %v93
    %100 = vmatprep.subr.bf16.mxu0 0
    %101 = vmatpush1.bf16.msra.mxu0 0
    %102 = vmatprep.subr.bf16.mxu0 0
    %103 = vmatpush1.bf16.msra.mxu0 0
    %104 = vmatprep.subr.bf16.mxu0 0
    %105 = vmatpush1.bf16.msra.mxu0 0
    %106 = vmatprep.subr.bf16.mxu0 0
    %107 = vmatpush1.bf16.msra.mxu0 0
    %108 = vmatprep.subr.bf16.mxu0 0
    %109 = vmatpush1.bf16.msra.mxu0 0
    %110 = vmatprep.subr.bf16.mxu0 0
    %111 = vmatpush1.bf16.msra.mxu0 0
    %112 = vmatprep.subr.bf16.mxu0 0
    %113 = vmatpush1.bf16.msra.mxu0 0
    %114 = vmatprep.subr.bf16.mxu0 0
    %115 = vmatpush1.bf16.msra.mxu0 0
    %116 = vmatprep.subr.bf16.mxu0 0
    %117 = vmatpush1.bf16.msra.mxu0 0
    %118 = vmatprep.subr.bf16.mxu0 0
    %119 = vmatpush1.bf16.msra.mxu0 0
    %120 = vmatprep.subr.bf16.mxu0 0
    %121 = vmatpush1.bf16.msra.mxu0 0
    %122 = vmatprep.subr.bf16.mxu0 0
    %123 = vmatpush1.bf16.msra.mxu0 0
    %124 = vmatprep.subr.bf16.mxu0 0
    %125 = vmatpush1.bf16.msra.mxu0 0
    %126 = vmatprep.subr.bf16.mxu0 0
    %127 = vmatpush1.bf16.msra.mxu0 0
    %128 = vmatprep.subr.bf16.mxu0 0
    %129 = vmatpush1.bf16.msra.mxu0 0
    %130 = vmatprep.mubr.bf16.mxu0 0
    %131 = vmatmul.mubr.bf16.gmra.mrb[0].mxu0 %v89
    %v132 = vpop.f32.mrb[0].mxu0
    %v133 = vadd.f32 %v75, %v132
    %v134 = vpop.f32.mrb[0].mxu0
    %v135 = vadd.f32 %v79, %v134
    %v136 = vpop.f32.mrb[0].mxu0
    %v137 = vpop.f32.mrb[0].mxu0
    %138 = vdwg.mxu0
    %v139 = vmax.f32 %v133, 0.0
    %v140 = vmax.f32 %v135, 0.0
    %v141 = vpack.c.bf16 %v139, %v139
    %v142 = vpack.c.bf16 %v140, %v140
    %v143 = vld [vmem:[#allocation5] sm:$0xff]
    %v144 = vld [vmem:[#allocation5 + $0x8] sm:$0xff]
    %v145 = vld [vmem:[#allocation5 + $0x10] sm:$0xff]
    %v146 = vld [vmem:[#allocation5 + $0x18] sm:$0xff]
    %v147 = vld [vmem:[#allocation5 + $0x20] sm:$0xff]
    %v148 = vld [vmem:[#allocation5 + $0x28] sm:$0xff]
    %v149 = vld [vmem:[#allocation5 + $0x30] sm:$0xff]
    %v150 = vld [vmem:[#allocation5 + $0x38] sm:$0xff]
    %v151 = vld [vmem:[#allocation5 + $0x40] sm:$0xff]
    %v152 = vld [vmem:[#allocation5 + $0x48] sm:$0xff]
    %v153 = vld [vmem:[#allocation5 + $0x50] sm:$0xff]
    %v154 = vld [vmem:[#allocation5 + $0x58] sm:$0xff]
    %v155 = vld [vmem:[#allocation5 + $0x60] sm:$0xff]
    %v156 = vld [vmem:[#allocation5 + $0x68] sm:$0xff]
    %v157 = vld [vmem:[#allocation5 + $0x70] sm:$0xff]
    %v158 = vld [vmem:[#allocation5 + $0x78] sm:$0xff]
    %v159 = vld [vmem:[#allocation5 + $0x80] sm:$0xff]
    %v160 = vld [vmem:[#allocation5 + $0x88] sm:$0xff]
    %v161 = vld [vmem:[#allocation5 + $0x90] sm:$0xff]
    %v162 = vld [vmem:[#allocation5 + $0x98] sm:$0xff]
    %v163 = vld [vmem:[#allocation5 + $0xa0] sm:$0xff]
    %v164 = vld [vmem:[#allocation5 + $0xa8] sm:$0xff]
    %v165 = vld [vmem:[#allocation5 + $0xb0] sm:$0xff]
    %v166 = vld [vmem:[#allocation5 + $0xb8] sm:$0xff]
    %v167 = vld [vmem:[#allocation5 + $0xc0] sm:$0xff]
    %v168 = vld [vmem:[#allocation5 + $0xc8] sm:$0xff]
    %v169 = vld [vmem:[#allocation5 + $0xd0] sm:$0xff]
    %v170 = vld [vmem:[#allocation5 + $0xd8] sm:$0xff]
    %v171 = vld [vmem:[#allocation5 + $0xe0] sm:$0xff]
    %v172 = vld [vmem:[#allocation5 + $0xe8] sm:$0xff]
    %v173 = vld [vmem:[#allocation5 + $0xf0] sm:$0xff]
    %v174 = vld [vmem:[#allocation5 + $0xf8] sm:$0xff]
    %v175 = vld [vmem:[%s4] sm:$0x3]
    %v177 = vlaneseq
    %v178 = vshrl.u32 %v177, 7
    %v179 = vsub.s32 0, %v178
    %v180 = vrot.slane %v175, %v179
    %v181 = vlaneseq
    %v182 = vshrl.u32 %v181, 7
    %v183 = vsub.s32 1, %v182
    %v184 = vrot.slane %v175, %v183
    %v219 = vunpack.c.l.b16 %v143
    %v220 = vunpack.c.h.b16 %v143
    %v221 = vunpack.c.l.b16 %v144
    %v222 = vunpack.c.h.b16 %v144
    %v223 = vunpack.c.l.b16 %v145
    %v224 = vunpack.c.h.b16 %v145
    %v225 = vunpack.c.l.b16 %v146
    %v226 = vunpack.c.h.b16 %v146
    %v227 = vunpack.c.l.b16 %v147
    %v228 = vunpack.c.h.b16 %v147
    %v229 = vunpack.c.l.b16 %v148
    %v230 = vunpack.c.h.b16 %v148
    %v231 = vunpack.c.l.b16 %v149
    %v232 = vunpack.c.h.b16 %v149
    %v233 = vunpack.c.l.b16 %v150
    %v234 = vunpack.c.h.b16 %v150
    %v235 = vunpack.c.l.b16 %v151
    %v236 = vunpack.c.h.b16 %v151
    %v237 = vunpack.c.l.b16 %v152
    %v238 = vunpack.c.h.b16 %v152
    %v239 = vunpack.c.l.b16 %v153
    %v240 = vunpack.c.h.b16 %v153
    %v241 = vunpack.c.l.b16 %v154
    %v242 = vunpack.c.h.b16 %v154
    %v243 = vunpack.c.l.b16 %v155
    %v244 = vunpack.c.h.b16 %v155
    %v245 = vunpack.c.l.b16 %v156
    %v246 = vunpack.c.h.b16 %v156
    %v247 = vunpack.c.l.b16 %v157
    %v248 = vunpack.c.h.b16 %v157
    %v249 = vunpack.c.l.b16 %v158
    %v250 = vunpack.c.h.b16 %v158
    %v251 = vunpack.c.l.b16 %v159
    %v252 = vunpack.c.h.b16 %v159
    %v253 = vunpack.c.l.b16 %v160
    %v254 = vunpack.c.h.b16 %v160
    %v255 = vunpack.c.l.b16 %v161
    %v256 = vunpack.c.h.b16 %v161
    %v257 = vunpack.c.l.b16 %v162
    %v258 = vunpack.c.h.b16 %v162
    %v259 = vunpack.c.l.b16 %v163
    %v260 = vunpack.c.h.b16 %v163
    %v261 = vunpack.c.l.b16 %v164
    %v262 = vunpack.c.h.b16 %v164
    %v263 = vunpack.c.l.b16 %v165
    %v264 = vunpack.c.h.b16 %v165
    %v265 = vunpack.c.l.b16 %v166
    %v266 = vunpack.c.h.b16 %v166
    %v267 = vunpack.c.l.b16 %v167
    %v268 = vunpack.c.h.b16 %v167
    %v269 = vunpack.c.l.b16 %v168
    %v270 = vunpack.c.h.b16 %v168
    %v271 = vunpack.c.l.b16 %v169
    %v272 = vunpack.c.h.b16 %v169
    %v273 = vunpack.c.l.b16 %v170
    %v274 = vunpack.c.h.b16 %v170
    %v275 = vunpack.c.l.b16 %v171
    %v276 = vunpack.c.h.b16 %v171
    %v277 = vunpack.c.l.b16 %v172
    %v278 = vunpack.c.h.b16 %v172
    %v279 = vunpack.c.l.b16 %v173
    %v280 = vunpack.c.h.b16 %v173
    %v281 = vunpack.c.l.b16 %v174
    %v282 = vunpack.c.h.b16 %v174
    %v283 = vpack.c.b16 %v221, %v219
    %v284 = vpack.c.b16 %v222, %v220
    %v285 = vpack.c.b16 %v225, %v223
    %v286 = vpack.c.b16 %v226, %v224
    %v287 = vpack.c.b16 %v229, %v227
    %v288 = vpack.c.b16 %v230, %v228
    %v289 = vpack.c.b16 %v233, %v231
    %v290 = vpack.c.b16 %v234, %v232
    %v291 = vpack.c.b16 %v237, %v235
    %v292 = vpack.c.b16 %v238, %v236
    %v293 = vpack.c.b16 %v241, %v239
    %v294 = vpack.c.b16 %v242, %v240
    %v295 = vpack.c.b16 %v245, %v243
    %v296 = vpack.c.b16 %v246, %v244
    %v297 = vpack.c.b16 %v249, %v247
    %v298 = vpack.c.b16 %v250, %v248
    %v299 = vpack.c.b16 %v253, %v251
    %v300 = vpack.c.b16 %v254, %v252
    %v301 = vpack.c.b16 %v257, %v255
    %v302 = vpack.c.b16 %v258, %v256
    %v303 = vpack.c.b16 %v261, %v259
    %v304 = vpack.c.b16 %v262, %v260
    %v305 = vpack.c.b16 %v265, %v263
    %v306 = vpack.c.b16 %v266, %v264
    %v307 = vpack.c.b16 %v269, %v267
    %v308 = vpack.c.b16 %v270, %v268
    %v309 = vpack.c.b16 %v273, %v271
    %v310 = vpack.c.b16 %v274, %v272
    %v311 = vpack.c.b16 %v277, %v275
    %v312 = vpack.c.b16 %v278, %v276
    %v313 = vpack.c.b16 %v281, %v279
    %v314 = vpack.c.b16 %v282, %v280
    %347 = vmatprep.subr.bf16.mxu0 %v284
    %348 = vmatpush1.bf16.msra.mxu0 %v283
    %349 = vmatprep.subr.bf16.mxu0 %v286
    %350 = vmatpush1.bf16.msra.mxu0 %v285
    %351 = vmatprep.subr.bf16.mxu0 %v288
    %352 = vmatpush1.bf16.msra.mxu0 %v287
    %353 = vmatprep.subr.bf16.mxu0 %v290
    %354 = vmatpush1.bf16.msra.mxu0 %v289
    %355 = vmatprep.subr.bf16.mxu0 %v292
    %356 = vmatpush1.bf16.msra.mxu0 %v291
    %357 = vmatprep.subr.bf16.mxu0 %v294
    %358 = vmatpush1.bf16.msra.mxu0 %v293
    %359 = vmatprep.subr.bf16.mxu0 %v296
    %360 = vmatpush1.bf16.msra.mxu0 %v295
    %361 = vmatprep.subr.bf16.mxu0 %v298
    %362 = vmatpush1.bf16.msra.mxu0 %v297
    %363 = vmatprep.subr.bf16.mxu0 %v300
    %364 = vmatpush1.bf16.msra.mxu0 %v299
    %365 = vmatprep.subr.bf16.mxu0 %v302
    %366 = vmatpush1.bf16.msra.mxu0 %v301
    %367 = vmatprep.subr.bf16.mxu0 %v304
    %368 = vmatpush1.bf16.msra.mxu0 %v303
    %369 = vmatprep.subr.bf16.mxu0 %v306
    %370 = vmatpush1.bf16.msra.mxu0 %v305
    %371 = vmatprep.subr.bf16.mxu0 %v308
    %372 = vmatpush1.bf16.msra.mxu0 %v307
    %373 = vmatprep.subr.bf16.mxu0 %v310
    %374 = vmatpush1.bf16.msra.mxu0 %v309
    %375 = vmatprep.subr.bf16.mxu0 %v312
    %376 = vmatpush1.bf16.msra.mxu0 %v311
    %377 = vmatprep.subr.bf16.mxu0 %v314
    %378 = vmatpush1.bf16.msra.mxu0 %v313
    %379 = vmatprep.mubr.bf16.mxu0 %v142
    %380 = vmatmul.mubr.bf16.gmra.mrb[0].mxu0 %v141
    %v381 = vpop.f32.mrb[0].mxu0
    %v382 = vadd.f32 %v180, %v381
    %v383 = vpop.f32.mrb[0].mxu0
    %v384 = vadd.f32 %v184, %v383
    %v385 = vpop.f32.mrb[0].mxu0
    %v386 = vpop.f32.mrb[0].mxu0
    %387 = vdwg.mxu0
    %v388 = vmax.f32 %v382, 0.0
    %v389 = vmax.f32 %v384, 0.0
    %v390 = vpack.c.bf16 %v388, %v388
    %v391 = vpack.c.bf16 %v389, %v389
    %v392 = vld [vmem:[#allocation7] sm:$0xf]
    %v393 = vld [vmem:[#allocation7 + $0x4] sm:$0xf]
    %v394 = vld [vmem:[#allocation7 + $0x8] sm:$0xf]
    %v395 = vld [vmem:[#allocation7 + $0xc] sm:$0xf]
    %v396 = vld [vmem:[#allocation7 + $0x10] sm:$0xf]
    %v397 = vld [vmem:[#allocation7 + $0x14] sm:$0xf]
    %v398 = vld [vmem:[#allocation7 + $0x18] sm:$0xf]
    %v399 = vld [vmem:[#allocation7 + $0x1c] sm:$0xf]
    %v400 = vld [vmem:[#allocation7 + $0x20] sm:$0xf]
    %v401 = vld [vmem:[#allocation7 + $0x24] sm:$0xf]
    %v402 = vld [vmem:[#allocation7 + $0x28] sm:$0xf]
    %v403 = vld [vmem:[#allocation7 + $0x2c] sm:$0xf]
    %v404 = vld [vmem:[#allocation7 + $0x30] sm:$0xf]
    %v405 = vld [vmem:[#allocation7 + $0x34] sm:$0xf]
    %v406 = vld [vmem:[#allocation7 + $0x38] sm:$0xf]
    %v407 = vld [vmem:[#allocation7 + $0x3c] sm:$0xf]
    %v408 = vld [vmem:[#allocation7 + $0x40] sm:$0xf]
    %v409 = vld [vmem:[#allocation7 + $0x44] sm:$0xf]
    %v410 = vld [vmem:[#allocation7 + $0x48] sm:$0xf]
    %v411 = vld [vmem:[#allocation7 + $0x4c] sm:$0xf]
    %v412 = vld [vmem:[#allocation7 + $0x50] sm:$0xf]
    %v413 = vld [vmem:[#allocation7 + $0x54] sm:$0xf]
    %v414 = vld [vmem:[#allocation7 + $0x58] sm:$0xf]
    %v415 = vld [vmem:[#allocation7 + $0x5c] sm:$0xf]
    %v416 = vld [vmem:[#allocation7 + $0x60] sm:$0xf]
    %v417 = vld [vmem:[#allocation7 + $0x64] sm:$0xf]
    %v418 = vld [vmem:[#allocation7 + $0x68] sm:$0xf]
    %v419 = vld [vmem:[#allocation7 + $0x6c] sm:$0xf]
    %v420 = vld [vmem:[#allocation7 + $0x70] sm:$0xf]
    %v421 = vld [vmem:[#allocation7 + $0x74] sm:$0xf]
    %v422 = vld [vmem:[#allocation7 + $0x78] sm:$0xf]
    %v423 = vld [vmem:[#allocation7 + $0x7c] sm:$0xf]
    %v456 = vunpack.c.l.b16 %v392
    %v457 = vunpack.c.l.b16 %v393
    %v458 = vunpack.c.l.b16 %v394
    %v459 = vunpack.c.l.b16 %v395
    %v460 = vunpack.c.l.b16 %v396
    %v461 = vunpack.c.l.b16 %v397
    %v462 = vunpack.c.l.b16 %v398
    %v463 = vunpack.c.l.b16 %v399
    %v464 = vunpack.c.l.b16 %v400
    %v465 = vunpack.c.l.b16 %v401
    %v466 = vunpack.c.l.b16 %v402
    %v467 = vunpack.c.l.b16 %v403
    %v468 = vunpack.c.l.b16 %v404
    %v469 = vunpack.c.l.b16 %v405
    %v470 = vunpack.c.l.b16 %v406
    %v471 = vunpack.c.l.b16 %v407
    %v472 = vunpack.c.l.b16 %v408
    %v473 = vunpack.c.l.b16 %v409
    %v474 = vunpack.c.l.b16 %v410
    %v475 = vunpack.c.l.b16 %v411
    %v476 = vunpack.c.l.b16 %v412
    %v477 = vunpack.c.l.b16 %v413
    %v478 = vunpack.c.l.b16 %v414
    %v479 = vunpack.c.l.b16 %v415
    %v480 = vunpack.c.l.b16 %v416
    %v481 = vunpack.c.l.b16 %v417
    %v482 = vunpack.c.l.b16 %v418
    %v483 = vunpack.c.l.b16 %v419
    %v484 = vunpack.c.l.b16 %v420
    %v485 = vunpack.c.l.b16 %v421
    %v486 = vunpack.c.l.b16 %v422
    %v487 = vunpack.c.l.b16 %v423
    %v488 = vpack.c.b16 %v457, %v456
    %v489 = vpack.c.b16 %v459, %v458
    %v490 = vpack.c.b16 %v461, %v460
    %v491 = vpack.c.b16 %v463, %v462
    %v492 = vpack.c.b16 %v465, %v464
    %v493 = vpack.c.b16 %v467, %v466
    %v494 = vpack.c.b16 %v469, %v468
    %v495 = vpack.c.b16 %v471, %v470
    %v496 = vpack.c.b16 %v473, %v472
    %v497 = vpack.c.b16 %v475, %v474
    %v498 = vpack.c.b16 %v477, %v476
    %v499 = vpack.c.b16 %v479, %v478
    %v500 = vpack.c.b16 %v481, %v480
    %v501 = vpack.c.b16 %v483, %v482
    %v502 = vpack.c.b16 %v485, %v484
    %v503 = vpack.c.b16 %v487, %v486
    %520 = vmatprep.subr.bf16.mxu0 0
    %521 = vmatpush1.bf16.msra.mxu0 %v488
    %522 = vmatprep.subr.bf16.mxu0 0
    %523 = vmatpush1.bf16.msra.mxu0 %v489
    %524 = vmatprep.subr.bf16.mxu0 0
    %525 = vmatpush1.bf16.msra.mxu0 %v490
    %526 = vmatprep.subr.bf16.mxu0 0
    %527 = vmatpush1.bf16.msra.mxu0 %v491
    %528 = vmatprep.subr.bf16.mxu0 0
    %529 = vmatpush1.bf16.msra.mxu0 %v492
    %530 = vmatprep.subr.bf16.mxu0 0
    %531 = vmatpush1.bf16.msra.mxu0 %v493
    %532 = vmatprep.subr.bf16.mxu0 0
    %533 = vmatpush1.bf16.msra.mxu0 %v494
    %534 = vmatprep.subr.bf16.mxu0 0
    %535 = vmatpush1.bf16.msra.mxu0 %v495
    %536 = vmatprep.subr.bf16.mxu0 0
    %537 = vmatpush1.bf16.msra.mxu0 %v496
    %538 = vmatprep.subr.bf16.mxu0 0
    %539 = vmatpush1.bf16.msra.mxu0 %v497
    %540 = vmatprep.subr.bf16.mxu0 0
    %541 = vmatpush1.bf16.msra.mxu0 %v498
    %542 = vmatprep.subr.bf16.mxu0 0
    %543 = vmatpush1.bf16.msra.mxu0 %v499
    %544 = vmatprep.subr.bf16.mxu0 0
    %545 = vmatpush1.bf16.msra.mxu0 %v500
    %546 = vmatprep.subr.bf16.mxu0 0
    %547 = vmatpush1.bf16.msra.mxu0 %v501
    %548 = vmatprep.subr.bf16.mxu0 0
    %549 = vmatpush1.bf16.msra.mxu0 %v502
    %550 = vmatprep.subr.bf16.mxu0 0
    %551 = vmatpush1.bf16.msra.mxu0 %v503
    %552 = vmatprep.mubr.bf16.mxu0 %v391
    %553 = vmatmul.mubr.bf16.gmra.mrb[0].mxu0 %v390
    %v554 = vpop.f32.mrb[0].mxu0
    %v555 = vadd.f32 0.0, %v554
    %v556 = vpop.f32.mrb[0].mxu0
    %v557 = vpop.f32.mrb[0].mxu0
    %v558 = vpop.f32.mrb[0].mxu0
    %559 = vdwg.mxu0
    %v560 = vld [vmem:[%s6] sm:$0x1]
    %v562 = vlaneseq
    %v563 = vshrl.u32 %v562, 7
    %v564 = vsub.s32 0, %v563
    %v565 = vrot.slane %v560, %v564
    %v567 = vadd.f32 %v555, %v565
    %vm568 = vcmask 25600
    %569 = vst.msk [vmem:[#allocation8] sm:$0x3] %vm568, %v567
    // Predicated region
    $region42: #{dqn_forward.1} parent=1 // pred_check
      _
    $region43: #{dqn_forward.1} parent=1 // pred_check_branch
      %571 = sbr.rel (0) target = $region45
    $region44: #{dqn_forward.1} parent=1 // pred_region
      %s573 = ssub.s32 32, 32
      %574 = vsyncadd [#allocation4], %s573
      %s576 = sshll.u32 [#allocation8], 4
      %s577 = int_to_ptr.vmem [resolvable:$true] %s576
      %579 = dma.vmem_to_hbm [thread:$0]  %s577, 32, %s7, [#allocation4]
    $region45: #{dqn_forward.1} parent=1 // pred_fallthru
      _
    // Predicated region
    $region46: #{dqn_forward.1} parent=1 // pred_check
      _
    $region47: #{dqn_forward.1} parent=1 // pred_check_branch
      %581 = sbr.rel (0) target = $region49
    $region48: #{dqn_forward.1} parent=1 // pred_region
      %582 = dma.done [#allocation4], 32
    $region49: #{dqn_forward.1} parent=1 // pred_fallthru
      _
    %583 = vsyncpa [#allocation3], 1
    %584 = vsyncpa [#allocation6], 1
    %585 = vsyncpa [#allocation4], 1

</llo_original>
